<compile_context>
chip_gen: v7x
topology: tpu7x:2x2x1
jax: 0.10.0
libtpu: 0.0.40
codegen_flags: <defaults>
</compile_context>

<pallas_src>
import functools

import jax
import jax.numpy as jnp
from jax.experimental import pallas as pl
from jax.experimental.pallas import tpu as pltpu


# ---------------------------------------------------------------------------
# Kernel
# ---------------------------------------------------------------------------
def _mixer_kernel(alpha_ref, w_ref, c_ref, o_ref):
    # alpha_ref: (2, D) resident across the grid
    # w_ref / c_ref / o_ref: (TILE_ROWS, D)
    wf = w_ref[...].astype(jnp.float32)
    cf = c_ref[...].astype(jnp.float32)
    alpha = alpha_ref[...].astype(jnp.float32)
    aw = alpha[0:1, :]                                  # (1, D)
    ac = alpha[1:2, :]                                  # (1, D)

    # single fused cross-lane reduction, f32 accumulation
    s = jnp.sum(wf * aw + cf * ac, axis=-1, keepdims=True)   # (TILE, 1)
    a = jax.nn.sigmoid(s)                                     # (TILE, 1)

    # alpha * w + (1 - alpha) * c  ==  c + alpha * (w - c)
    o_ref[...] = (cf + a * (wf - cf)).astype(o_ref.dtype)


# ---------------------------------------------------------------------------
# Tiling / wrapper
# ---------------------------------------------------------------------------
_VMEM_DATA_BUDGET = 24 << 20          # bytes for pipelined streams (v7x-safe)
_VMEM_LIMIT_BYTES = 40 << 20          # scoped VMEM limit (< 64 MiB physical on v7x)
_MAX_TILE_ROWS = 2048                 # roofline plateau; more rows buys nothing


def _choose_tile_rows(n_rows: int, d: int, itemsize: int) -> int:
    # 2 (double buffer) x 3 streams (w, c, out) x tile_rows x D x itemsize <= budget
    max_rows = _VMEM_DATA_BUDGET // (6 * max(d, 1) * max(itemsize, 1))
    max_rows = max(8, (max_rows // 8) * 8)     # keep sublane-aligned
    max_rows = min(max_rows, _MAX_TILE_ROWS)
    if n_rows <= max_rows:
        # One block covering every row; block dim == full array dim, so the
        # (8,128) divisibility rule is satisfied even for odd row counts.
        return n_rows
    return max_rows


@functools.partial(jax.jit, static_argnames=("tile_rows",))
def _mixer_2d(alpha2d, w2d, c2d, *, tile_rows: int):
    n, d = w2d.shape
    grid = (pl.cdiv(n, tile_rows),)
    return pl.pallas_call(
        _mixer_kernel,
        out_shape=jax.ShapeDtypeStruct((n, d), w2d.dtype),
        grid_spec=pltpu.PrefetchScalarGridSpec(
            num_scalar_prefetch=0,
            grid=grid,
            in_specs=[
                pl.BlockSpec((2, d), lambda i: (0, 0)),          # alpha (both halves)
                pl.BlockSpec((tile_rows, d), lambda i: (i, 0)),  # wembs rows
                pl.BlockSpec((tile_rows, d), lambda i: (i, 0)),  # cembs rows
            ],
            out_specs=pl.BlockSpec((tile_rows, d), lambda i: (i, 0)),
        ),
        compiler_params=pltpu.CompilerParams(
            dimension_semantics=("parallel",),
            vmem_limit_bytes=_VMEM_LIMIT_BYTES,
        ),
    )(alpha2d, w2d, c2d)


def embedding_mixer_forward(wembs, cembs, alpha_param):
    """alpha_param: (2*emb_dim, 1), matching the nn.Parameter in the module."""
    d = wembs.shape[-1]
    # Split the concat-weight into its wemb / cemb halves -> (2, D)
    alpha2d = jnp.stack([alpha_param[:d, 0], alpha_param[d:, 0]], axis=0)

    if wembs.ndim == 3:           # (m, b, d)  -- 3-D einsum branch
        m, b, _ = wembs.shape
        n = m * b
        tile_rows = _choose_tile_rows(n, d, jnp.dtype(wembs.dtype).itemsize)
        out = _mixer_2d(alpha2d, wembs.reshape(n, d), cembs.reshape(n, d),
                        tile_rows=tile_rows)
        return out.reshape(m, b, d)
    else:                         # (b, d)     -- 2-D einsum branch
        n = wembs.shape[0]
        tile_rows = _choose_tile_rows(n, d, jnp.dtype(wembs.dtype).itemsize)
        return _mixer_2d(alpha2d, wembs, cembs, tile_rows=tile_rows)


# ---------------------------------------------------------------------------
# Reference + test
# ---------------------------------------------------------------------------
def _reference(wembs, cembs, alpha_param):
    alpha_in = jnp.concatenate([wembs, cembs], axis=-1)
    if wembs.ndim == 3:
        a = jax.nn.sigmoid(jnp.einsum('do,mbd->mb', alpha_param, alpha_in))
    else:
        a = jax.nn.sigmoid(jnp.einsum('do,bd->b', alpha_param, alpha_in))
    a = a[..., None]
    return a * wembs + (1.0 - a) * cembs


if __name__ == "__main__":
    key = jax.random.PRNGKey(0)
    k_alpha, k_w, k_c, k_w2, k_c2 = jax.random.split(key, 5)

    emb_dim = 32
    seq, batch = 8, 2

    # deterministic parameter init matching uniform_(-0.05, 0.05)
    alpha_param = jax.random.uniform(
        k_alpha, (emb_dim * 2, 1), minval=-0.05, maxval=0.05,
        dtype=jnp.float32)

    # 3-D case (m, b, d)
    wembs = jax.random.normal(k_w, (seq, batch, emb_dim), dtype=jnp.float32)
    cembs = jax.random.normal(k_c, (seq, batch, emb_dim), dtype=jnp.float32)
    out3 = jax.block_until_ready(
        embedding_mixer_forward(wembs, cembs, alpha_param))
    ref3 = _reference(wembs, cembs, alpha_param)
    assert out3.shape == (seq, batch, emb_dim)
    assert jnp.allclose(out3, ref3, atol=1e-5, rtol=1e-5)

    # 2-D case (b, d)
    wembs2 = jax.random.normal(k_w2, (batch, emb_dim), dtype=jnp.float32)
    cembs2 = jax.random.normal(k_c2, (batch, emb_dim), dtype=jnp.float32)
    out2 = jax.block_until_ready(
        embedding_mixer_forward(wembs2, cembs2, alpha_param))
    ref2 = _reference(wembs2, cembs2, alpha_param)
    assert out2.shape == (batch, emb_dim)
    assert jnp.allclose(out2, ref2, atol=1e-5, rtol=1e-5)

    print("KERNEL_OK")
</pallas_src>

<mosaic_0001>
module attributes {stable_mosaic.version = 11 : i64} {
  func.func @_mixer_kernel(%arg0: i32, %arg1: memref<2x32xf32, #tpu.memory_space<vmem>>, %arg2: memref<16x32xf32, #tpu.memory_space<vmem>>, %arg3: memref<16x32xf32, #tpu.memory_space<vmem>>, %arg4: memref<16x32xf32, #tpu.memory_space<vmem>>) attributes {dimension_semantics = [#tpu.dimension_semantics<parallel>], iteration_bounds = array<i64: 1>, scalar_prefetch = 0 : i64, scratch_operands = 0 : i64, tpu.core_type = #tpu.core_type<tc>, window_params = [{pipeline_mode = #tpu.pipeline_mode<synchronous>, transform_indices = @transform_0, window_bounds = array<i64: 2, 32>}, {transform_indices = @transform_1, window_bounds = array<i64: 16, 32>}, {transform_indices = @transform_2, window_bounds = array<i64: 16, 32>}, {transform_indices = @transform_3, window_bounds = array<i64: 16, 32>}]} {
    %c0 = arith.constant 0 : index
    %c0_0 = arith.constant 0 : index
    %0 = vector.load %arg2[%c0, %c0_0] : memref<16x32xf32, #tpu.memory_space<vmem>>, vector<16x32xf32>
    %c0_1 = arith.constant 0 : index
    %c0_2 = arith.constant 0 : index
    %1 = vector.load %arg3[%c0_1, %c0_2] : memref<16x32xf32, #tpu.memory_space<vmem>>, vector<16x32xf32>
    %c0_3 = arith.constant 0 : index
    %c0_4 = arith.constant 0 : index
    %2 = vector.load %arg1[%c0_3, %c0_4] : memref<2x32xf32, #tpu.memory_space<vmem>>, vector<2x32xf32>
    %3 = vector.extract_strided_slice %2 {offsets = [0, 0], sizes = [1, 32], strides = [1, 1]} : vector<2x32xf32> to vector<1x32xf32>
    %4 = vector.extract_strided_slice %2 {offsets = [1, 0], sizes = [1, 32], strides = [1, 1]} : vector<2x32xf32> to vector<1x32xf32>
    %5 = vector.broadcast %3 : vector<1x32xf32> to vector<16x32xf32>
    %6 = arith.mulf %0, %5 : vector<16x32xf32>
    %7 = vector.broadcast %4 : vector<1x32xf32> to vector<16x32xf32>
    %8 = arith.mulf %1, %7 : vector<16x32xf32>
    %9 = arith.addf %6, %8 : vector<16x32xf32>
    %cst = arith.constant dense<0.000000e+00> : vector<16xf32>
    %10 = vector.multi_reduction <add>, %9, %cst [1] : vector<16x32xf32> to vector<16xf32>
    %11 = vector.shape_cast %10 : vector<16xf32> to vector<16x1xf32>
    %12 = arith.negf %11 : vector<16x1xf32>
    %13 = math.exp %12 : vector<16x1xf32>
    %cst_5 = arith.constant 1.000000e+00 : f32
    %14 = vector.broadcast %cst_5 : f32 to vector<16x1xf32>
    %15 = arith.addf %14, %13 : vector<16x1xf32>
    %16 = arith.divf %14, %15 : vector<16x1xf32>
    %17 = arith.subf %0, %1 : vector<16x32xf32>
    %18 = vector.broadcast %16 : vector<16x1xf32> to vector<16x32xf32>
    %19 = arith.mulf %18, %17 : vector<16x32xf32>
    %20 = arith.addf %1, %19 : vector<16x32xf32>
    %c0_6 = arith.constant 0 : index
    %c0_7 = arith.constant 0 : index
    %21 = vector.load %arg4[%c0_6, %c0_7] : memref<16x32xf32, #tpu.memory_space<vmem>>, vector<16x32xf32>
    tpu.vector_store %arg4[%c0_6, %c0_7], %20 {strides = array<i32>} : memref<16x32xf32, #tpu.memory_space<vmem>>, vector<16x32xf32>,
    return
  }
  func.func @transform_0(%arg0: i32) -> (i32, i32) {
    %c0_i32 = arith.constant 0 : i32
    %c0_i32_0 = arith.constant 0 : i32
    %c0_i32_1 = arith.constant 0 : i32
    return %c0_i32, %c0_i32_0 : i32, i32
  }
  func.func @transform_1(%arg0: i32) -> (i32, i32) {
    %c0_i32 = arith.constant 0 : i32
    %c0_i32_0 = arith.constant 0 : i32
    return %arg0, %c0_i32 : i32, i32
  }
  func.func @transform_2(%arg0: i32) -> (i32, i32) {
    %c0_i32 = arith.constant 0 : i32
    %c0_i32_0 = arith.constant 0 : i32
    return %arg0, %c0_i32 : i32, i32
  }
  func.func @transform_3(%arg0: i32) -> (i32, i32) {
    %c0_i32 = arith.constant 0 : i32
    %c0_i32_0 = arith.constant 0 : i32
    return %arg0, %c0_i32 : i32, i32
  }
}

</mosaic_0001>

<llo_original>
// kernel: _mixer_2d.1
$region0: #{_mixer_2d.1}
  #allocation0 [shape = 'u32[]', space=smem, size = 0x4, offset = 0x4, fixed_abs, tag = 'smem constant byte address 0x4 - core index']
  #allocation1 [shape = 'u32[144,128]{1,0:T(1,128)}', space=vmem, size = 0x12000, scoped, tag = 'internal scratch']
  %s0 = inlined_call_operand.hbm [shape: f32[2,32], index: 0, kind: input, shape index: {}]
  %s1 = inlined_call_operand.hbm [shape: f32[16,32], index: 1, kind: input, shape index: {}]
  %s2 = inlined_call_operand.hbm [shape: f32[16,32], index: 2, kind: input, shape index: {}]
  %s3 = inlined_call_operand.hbm [shape: f32[16,32], index: 3, kind: output, shape index: {}]
  %s4 = sld [smem:[#allocation0]]
  $region34: #{_mixer_2d.1} parent=0
    _
  %s6 = ssub.s32 1, %s4
  %s7 = scalar_select 0, %s6, %s4
  $region1: #{_mixer_2d.1} parent=0
    #allocation2 [shape = 'u8[1024]{0}', space=vmem, size = 0x400, scoped, tag = 'input window, operand 0, single buffered']
    #allocation3 [shape = 's32[1]{0}', space=sflag, size = 0x4, scoped, tag = 'scoped memory for _mixer_2d.1']
    #allocation4 [shape = 's32[1]{0}', space=sflag, size = 0x4, scoped, tag = 'scoped memory for _mixer_2d.1']
    #allocation5 [shape = 'u8[8192]{0}', space=vmem, size = 0x2000, scoped, tag = 'input window, operand 1, single buffered']
    #allocation6 [shape = 's32[1]{0}', space=sflag, size = 0x4, scoped, tag = 'scoped memory for _mixer_2d.1']
    #allocation7 [shape = 'u8[8192]{0}', space=vmem, size = 0x2000, scoped, tag = 'input window, operand 2, single buffered']
    #allocation8 [shape = 'u8[8192]{0}', space=vmem, size = 0x2000, scoped, tag = 'output window, operand 0, single buffered']
    %8 = vsyncpa [#allocation3], 0
    %9 = vsyncpa [#allocation6], 0
    %10 = vsyncpa [#allocation4], 0
    // Predicated region
    $region2: #{_mixer_2d.1} parent=1 // pred_check
      _
    $region3: #{_mixer_2d.1} parent=1 // pred_check_branch
      %12 = sbr.rel (0) target = $region5
    $region4: #{_mixer_2d.1} parent=1 // pred_region
      %s14 = ssub.s32 32, 32
      %15 = vsyncadd [#allocation3], %s14
      %s17 = sshll.u32 [#allocation2], 4
      %s18 = int_to_ptr.vmem [resolvable:$true] %s17
      %20 = dma.hbm_to_vmem [thread:$0]  %s0, 32, %s18, [#allocation3]
    $region5: #{_mixer_2d.1} parent=1 // pred_fallthru
      _
    // Predicated region
    $region6: #{_mixer_2d.1} parent=1 // pred_check
      _
    $region7: #{_mixer_2d.1} parent=1 // pred_check_branch
      %22 = sbr.rel (0) target = $region9
    $region8: #{_mixer_2d.1} parent=1 // pred_region
      %s24 = ssub.s32 256, 256
      %25 = vsyncadd [#allocation6], %s24
      %s26 = sshll.u32 [#allocation5], 4
      %s27 = int_to_ptr.vmem [resolvable:$true] %s26
      %32 = dma.hbm_to_vmem [thread:$0]  %s1, 256, %s27, [#allocation6], 128, 128, 8
    $region9: #{_mixer_2d.1} parent=1 // pred_fallthru
      _
    // Predicated region
    $region10: #{_mixer_2d.1} parent=1 // pred_check
      _
    $region11: #{_mixer_2d.1} parent=1 // pred_check_branch
      %34 = sbr.rel (0) target = $region13
    $region12: #{_mixer_2d.1} parent=1 // pred_region
      %s36 = ssub.s32 256, 256
      %37 = vsyncadd [#allocation6], %s36
      %s38 = sshll.u32 [#allocation7], 4
      %s39 = int_to_ptr.vmem [resolvable:$true] %s38
      %44 = dma.hbm_to_vmem [thread:$0]  %s2, 256, %s39, [#allocation6], 128, 128, 8
    $region13: #{_mixer_2d.1} parent=1 // pred_fallthru
      _
    // Predicated region
    $region14: #{_mixer_2d.1} parent=1 // pred_check
      _
    $region15: #{_mixer_2d.1} parent=1 // pred_check_branch
      %46 = sbr.rel (0) target = $region17
    $region16: #{_mixer_2d.1} parent=1 // pred_region
      %47 = dma.done [#allocation3], 32
    $region17: #{_mixer_2d.1} parent=1 // pred_fallthru
      _
    // Predicated region
    $region18: #{_mixer_2d.1} parent=1 // pred_check
      _
    $region19: #{_mixer_2d.1} parent=1 // pred_check_branch
      %49 = sbr.rel (0) target = $region21
    $region20: #{_mixer_2d.1} parent=1 // pred_region
      %50 = dma.done [#allocation6], 256
    $region21: #{_mixer_2d.1} parent=1 // pred_fallthru
      _
    // Predicated region
    $region22: #{_mixer_2d.1} parent=1 // pred_check
      _
    $region23: #{_mixer_2d.1} parent=1 // pred_check_branch
      %52 = sbr.rel (0) target = $region25
    $region24: #{_mixer_2d.1} parent=1 // pred_region
      %53 = dma.done [#allocation6], 256
    $region25: #{_mixer_2d.1} parent=1 // pred_fallthru
      _
    %v54 = vld [vmem:[#allocation5] sm:$0xff]
    %v55 = vld [vmem:[#allocation5 + $0x8] sm:$0xff]
    %v56 = vld [vmem:[#allocation7] sm:$0xff]
    %v57 = vld [vmem:[#allocation7 + $0x8] sm:$0xff]
    %v58 = vld [vmem:[#allocation2] sm:$0x3]
    %v59 = vlaneseq
    %v60 = vshrl.u32 %v59, 7
    %v61 = vsub.s32 0, %v60
    %v62 = vrot.slane %v58, %v61
    %v63 = vmul.f32 %v54, %v62
    %v64 = vmul.f32 %v55, %v62
    %v65 = vlaneseq
    %v66 = vshrl.u32 %v65, 7
    %v67 = vsub.s32 1, %v66
    %v68 = vrot.slane %v58, %v67
    %v69 = vmul.f32 %v56, %v68
    %v70 = vmul.f32 %v57, %v68
    %v71 = vadd.f32 %v63, %v69
    %v72 = vadd.f32 %v64, %v70
    %vm73 = vcmask 261120
    %v74 = vsel %vm73, %v71, 0.0
    %75 = vadd.xlane.f32.xlu0 %v74
    %v76 = vpop.xlane.xlu0 %75
    %v77 = vsel %vm73, %v72, 0.0
    %78 = vadd.xlane.f32.xlu0 %v77
    %v79 = vpop.xlane.xlu0 %78
    %v80 = vxor.u32 %v76, 2147483648
    %v81 = vxor.u32 %v79, 2147483648
    %v82 = vmul.f32 %v80, 1.442695
    %v83 = vpow.pop %v82
    %v84 = vmul.f32 %v81, 1.442695
    %v85 = vpow.pop %v84
    %v86 = vadd.f32 %v83, 1.0
    %v87 = vadd.f32 %v85, 1.0
    %v88 = vrcp.pop %v86
    %v89 = vmul.f32 1.0, %v88
    %v90 = vrcp.pop %v87
    %v91 = vmul.f32 1.0, %v90
    %v92 = vsub.f32 %v54, %v56
    %v93 = vsub.f32 %v55, %v57
    %v94 = vmul.f32 %v89, %v92
    %v95 = vmul.f32 %v91, %v93
    %v96 = vadd.f32 %v56, %v94
    %v97 = vadd.f32 %v57, %v95
    %98 = vst.msk [vmem:[#allocation8] sm:$0xff] %vm73, %v96
    %99 = vst.msk [vmem:[#allocation8 + $0x8] sm:$0xff] %vm73, %v97
    // Predicated region
    $region26: #{_mixer_2d.1} parent=1 // pred_check
      _
    $region27: #{_mixer_2d.1} parent=1 // pred_check_branch
      %101 = sbr.rel (0) target = $region29
    $region28: #{_mixer_2d.1} parent=1 // pred_region
      %s103 = ssub.s32 256, 256
      %104 = vsyncadd [#allocation4], %s103
      %s105 = sshll.u32 [#allocation8], 4
      %s106 = int_to_ptr.vmem [resolvable:$true] %s105
      %111 = dma.vmem_to_hbm [thread:$0]  %s106, 256, %s3, [#allocation4], 128, 128, 8
    $region29: #{_mixer_2d.1} parent=1 // pred_fallthru
      _
    // Predicated region
    $region30: #{_mixer_2d.1} parent=1 // pred_check
      _
    $region31: #{_mixer_2d.1} parent=1 // pred_check_branch
      %113 = sbr.rel (0) target = $region33
    $region32: #{_mixer_2d.1} parent=1 // pred_region
      %114 = dma.done [#allocation4], 256
    $region33: #{_mixer_2d.1} parent=1 // pred_fallthru
      _
    %115 = vsyncpa [#allocation3], 1
    %116 = vsyncpa [#allocation6], 1
    %117 = vsyncpa [#allocation4], 1

</llo_original>
